<compile_context>
chip_gen: v6e
topology: v6e:2x2x1
jax: 0.10.0
libtpu: 0.0.40
codegen_flags: <defaults>
</compile_context>

<pallas_src>
import functools

import jax
import jax.numpy as jnp
from jax.experimental import pallas as pl
from jax.experimental.pallas import tpu as pltpu

MARGIN = 0.5


def _triplet_loss_kernel(a_ref, p_ref, n_ref, o_ref, row_acc_ref, *,
                         batch_size, tile_rows, rows_per_core, margin):
    c = pl.program_id(0)          # TensorCore index (outer, "parallel")
    i = pl.program_id(1)          # batch-tile index within core ("arbitrary")

    @pl.when(i == 0)
    def _():
        row_acc_ref[...] = jnp.zeros_like(row_acc_ref)

    # Compute in f32 regardless of input dtype.
    a = a_ref[...].astype(jnp.float32)
    p = p_ref[...].astype(jnp.float32)
    n = n_ref[...].astype(jnp.float32)

    # Fused: (1 - pos_sim) - (1 - neg_sim) + m == sum(a * (n - p), axis=1) + m
    row_sum = jnp.sum(a * (n - p), axis=1, keepdims=True)        # (TB, 1)
    losses = jnp.maximum(row_sum + margin, 0.0)                  # (TB, 1)

    row0 = c * rows_per_core + i * tile_rows                     # first global row
    full_tile = row0 + tile_rows <= batch_size

    # Fast path: fully in-bounds tile, pure vector add (no iota/select).
    @pl.when(full_tile)
    def _():
        row_acc_ref[...] += losses

    # Slow path: ragged / padded tile, mask rows beyond the batch.
    @pl.when(jnp.logical_not(full_tile))
    def _():
        local_row = jax.lax.broadcasted_iota(jnp.int32, losses.shape, 0)
        valid = (row0 + local_row) < batch_size
        row_acc_ref[...] += jnp.where(valid, losses, 0.0)

    # Finalize once per core: reduce the per-row accumulator to a scalar and
    # broadcast it into this core's output block (wrapper sums and divides).
    @pl.when(i == pl.num_programs(1) - 1)
    def _():
        partial = jnp.sum(row_acc_ref[...])
        o_ref[...] = jnp.broadcast_to(partial, o_ref.shape).astype(jnp.float32)


def _chip_budget():
    """(bytes-per-input-stream tile budget, number of TensorCores to use)."""
    try:
        kind = jax.devices()[0].device_kind.lower()
    except Exception:
        kind = ""
    if "v7" in kind or "7x" in kind:
        return 3 << 20, 2           # 64 MiB VMEM per TC, 2 TCs/chip
    if "v6" in kind:
        return 6 << 20, 1           # 128 MiB VMEM, 1 TC
    if "v5" in kind:
        return 2 << 20, 1           # 128 MiB VMEM, 16 MiB scoped default
    return 2 << 20, 1               # conservative fallback


def triplet_loss(anchor, positive, negative, margin=MARGIN):
    """Pallas implementation of TripletLoss.forward."""
    B, D = anchor.shape
    assert positive.shape == (B, D) and negative.shape == (B, D)

    # Lane-dense feature dim: zero-pad D to a multiple of 128.  Exact, since
    # padded lanes contribute 0 to sum(a * (n - p)).
    pad = (-D) % 128
    if pad:
        anchor = jnp.pad(anchor, ((0, 0), (0, pad)))
        positive = jnp.pad(positive, ((0, 0), (0, pad)))
        negative = jnp.pad(negative, ((0, 0), (0, pad)))
    Dp = D + pad

    itemsize = jnp.dtype(anchor.dtype).itemsize
    budget_per_stream, num_cores = _chip_budget()

    # Byte-budgeted batch tile: largest multiple of 8 rows fitting the budget.
    row_bytes = Dp * itemsize
    tb = max(8, (budget_per_stream // row_bytes) // 8 * 8)
    if num_cores > 1 and B >= 8 * num_cores:
        # Make sure moderate batches still split across both v7x TensorCores.
        per_core_rows = -(-B // num_cores)
        per_core_rows = -(-per_core_rows // 8) * 8
        tb = min(tb, per_core_rows)
    TB = B if tb >= B else tb       # TB == B (full dim) or a multiple of 8

    total_tiles = pl.cdiv(B, TB)
    NC = num_cores if total_tiles >= num_cores else 1
    T = pl.cdiv(total_tiles, NC)    # tiles per core
    rows_per_core = T * TB

    in_spec = pl.BlockSpec((TB, Dp), lambda c, i: (c * T + i, 0))
    out_spec = pl.BlockSpec((1, 1, 128), lambda c, i: (c, 0, 0))

    kernel = functools.partial(
        _triplet_loss_kernel, batch_size=B, tile_rows=TB,
        rows_per_core=rows_per_core, margin=float(margin))

    tile_bytes = TB * Dp * itemsize
    # 3 input streams x 2 pipeline buffers + (TB,1) f32 scratch (lane padded)
    # + output block, plus headroom.
    vmem_limit = int(3 * 2 * tile_bytes + TB * 512 + 128 * 4 + (4 << 20))

    out = pl.pallas_call(
        kernel,
        grid=(NC, T),
        out_shape=jax.ShapeDtypeStruct((NC, 1, 128), jnp.float32),
        in_specs=[in_spec, in_spec, in_spec],
        out_specs=out_spec,
        scratch_shapes=[pltpu.VMEM((TB, 1), jnp.float32)],
        compiler_params=pltpu.CompilerParams(
            dimension_semantics=("parallel", "arbitrary"),
            vmem_limit_bytes=vmem_limit),
        cost_estimate=pl.CostEstimate(
            flops=3 * B * Dp,              # sub + mul + reduce-add per element
            transcendentals=0,
            bytes_accessed=3 * B * Dp * itemsize + NC * 128 * 4),
    )(anchor, positive, negative)

    # Sum per-core partials, then the single divide by the true batch size.
    return jnp.sum(out[:, 0, 0]) / B


def triplet_loss_ref(anchor, positive, negative, margin=MARGIN):
    a = anchor.astype(jnp.float32)
    p = positive.astype(jnp.float32)
    n = negative.astype(jnp.float32)
    pos_sim = jnp.sum(a * p, axis=1)
    neg_sim = jnp.sum(a * n, axis=1)
    losses = jnp.maximum((1.0 - pos_sim) - (1.0 - neg_sim) + margin, 0.0)
    return jnp.mean(losses)


if __name__ == "__main__":
    # Small deterministic shapes consistent with the module (batch of embeddings).
    key = jax.random.PRNGKey(0)
    k_a, k_p, k_n = jax.random.split(key, 3)
    B, D = 8, 32
    anchor = jax.random.normal(k_a, (B, D), dtype=jnp.float32)
    positive = jax.random.normal(k_p, (B, D), dtype=jnp.float32)
    negative = jax.random.normal(k_n, (B, D), dtype=jnp.float32)

    loss = jax.block_until_ready(triplet_loss(anchor, positive, negative))
    ref = jax.block_until_ready(triplet_loss_ref(anchor, positive, negative))
    assert jnp.allclose(loss, ref, rtol=1e-5, atol=1e-5), (loss, ref)

    # Larger shape: exercises the tiled grid, the ragged-tile mask and (on v7x)
    # the dual-TensorCore split.
    k2_a, k2_p, k2_n = jax.random.split(jax.random.PRNGKey(1), 3)
    B2, D2 = 1000, 256
    a2 = jax.random.normal(k2_a, (B2, D2), dtype=jnp.float32)
    p2 = jax.random.normal(k2_p, (B2, D2), dtype=jnp.float32)
    n2 = jax.random.normal(k2_n, (B2, D2), dtype=jnp.float32)

    loss2 = jax.block_until_ready(triplet_loss(a2, p2, n2))
    ref2 = jax.block_until_ready(triplet_loss_ref(a2, p2, n2))
    assert jnp.allclose(loss2, ref2, rtol=1e-5, atol=1e-5), (loss2, ref2)

    print("KERNEL_OK")
</pallas_src>

<mosaic_0001>
module attributes {stable_mosaic.version = 11 : i64} {
  func.func @_triplet_loss_kernel(%arg0: i32, %arg1: i32, %arg2: memref<8x128xf32, #tpu.memory_space<vmem>>, %arg3: memref<8x128xf32, #tpu.memory_space<vmem>>, %arg4: memref<8x128xf32, #tpu.memory_space<vmem>>, %arg5: memref<1x1x128xf32, #tpu.memory_space<vmem>>, %arg6: memref<8x1xf32, #tpu.memory_space<vmem>>) attributes {dimension_semantics = [#tpu.dimension_semantics<parallel>, #tpu.dimension_semantics<arbitrary>], iteration_bounds = array<i64: 1, 1>, scalar_prefetch = 0 : i64, scratch_operands = 1 : i64, tpu.core_type = #tpu.core_type<tc>, window_params = [{transform_indices = @transform_0, window_bounds = array<i64: 8, 128>}, {transform_indices = @transform_1, window_bounds = array<i64: 8, 128>}, {transform_indices = @transform_2, window_bounds = array<i64: 8, 128>}, {transform_indices = @transform_3, window_bounds = array<i64: 1, 1, 128>}]} {
    %c0_i32 = arith.constant 0 : i32
    %0 = arith.cmpi eq, %arg1, %c0_i32 : i32
    %1 = arith.extui %0 : i1 to i32
    %c0_i32_0 = arith.constant 0 : i32
    %2 = arith.cmpi ne, %1, %c0_i32_0 : i32
    scf.if %2 {
      %cst_15 = arith.constant 0.000000e+00 : f32
      %27 = vector.broadcast %cst_15 : f32 to vector<8x1xf32>
      %c0_16 = arith.constant 0 : index
      %c0_17 = arith.constant 0 : index
      %28 = vector.load %arg6[%c0_16, %c0_17] : memref<8x1xf32, #tpu.memory_space<vmem>>, vector<8x1xf32>
      tpu.vector_store %arg6[%c0_16, %c0_17], %27 {strides = array<i32>} : memref<8x1xf32, #tpu.memory_space<vmem>>, vector<8x1xf32>,
    } else {
    }
    %c0 = arith.constant 0 : index
    %c0_1 = arith.constant 0 : index
    %3 = vector.load %arg2[%c0, %c0_1] : memref<8x128xf32, #tpu.memory_space<vmem>>, vector<8x128xf32>
    %c0_2 = arith.constant 0 : index
    %c0_3 = arith.constant 0 : index
    %4 = vector.load %arg3[%c0_2, %c0_3] : memref<8x128xf32, #tpu.memory_space<vmem>>, vector<8x128xf32>
    %c0_4 = arith.constant 0 : index
    %c0_5 = arith.constant 0 : index
    %5 = vector.load %arg4[%c0_4, %c0_5] : memref<8x128xf32, #tpu.memory_space<vmem>>, vector<8x128xf32>
    %6 = arith.subf %5, %4 : vector<8x128xf32>
    %7 = arith.mulf %3, %6 : vector<8x128xf32>
    %cst = arith.constant dense<0.000000e+00> : vector<8xf32>
    %8 = vector.multi_reduction <add>, %7, %cst [1] : vector<8x128xf32> to vector<8xf32>
    %9 = vector.shape_cast %8 : vector<8xf32> to vector<8x1xf32>
    %cst_6 = arith.constant 5.000000e-01 : f32
    %10 = vector.broadcast %cst_6 : f32 to vector<8x1xf32>
    %11 = arith.addf %9, %10 : vector<8x1xf32>
    %cst_7 = arith.constant 0.000000e+00 : f32
    %12 = vector.broadcast %cst_7 : f32 to vector<8x1xf32>
    %13 = arith.maximumf %11, %12 : vector<8x1xf32>
    %c8_i32 = arith.constant 8 : i32
    %14 = arith.muli %arg0, %c8_i32 : i32
    %c8_i32_8 = arith.constant 8 : i32
    %15 = arith.muli %arg1, %c8_i32_8 : i32
    %16 = arith.addi %14, %15 : i32
    %c8_i32_9 = arith.constant 8 : i32
    %17 = arith.addi %16, %c8_i32_9 : i32
    %c8_i32_10 = arith.constant 8 : i32
    %18 = arith.cmpi sle, %17, %c8_i32_10 : i32
    %19 = arith.extui %18 : i1 to i32
    %c0_i32_11 = arith.constant 0 : i32
    %20 = arith.cmpi ne, %19, %c0_i32_11 : i32
    scf.if %20 {
      %c0_15 = arith.constant 0 : index
      %c0_16 = arith.constant 0 : index
      %27 = vector.load %arg6[%c0_15, %c0_16] : memref<8x1xf32, #tpu.memory_space<vmem>>, vector<8x1xf32>
      %28 = arith.addf %27, %13 : vector<8x1xf32>
      %c0_17 = arith.constant 0 : index
      %c0_18 = arith.constant 0 : index
      %29 = vector.load %arg6[%c0_17, %c0_18] : memref<8x1xf32, #tpu.memory_space<vmem>>, vector<8x1xf32>
      tpu.vector_store %arg6[%c0_17, %c0_18], %28 {strides = array<i32>} : memref<8x1xf32, #tpu.memory_space<vmem>>, vector<8x1xf32>,
    } else {
    }
    %true = arith.constant true
    %21 = arith.xori %18, %true : i1
    %22 = arith.extui %21 : i1 to i32
    %c0_i32_12 = arith.constant 0 : i32
    %23 = arith.cmpi ne, %22, %c0_i32_12 : i32
    scf.if %23 {
      %27 = tpu.iota {dimensions = array<i32: 0>} : vector<8x1xi32>
      %28 = vector.broadcast %16 : i32 to vector<8x1xi32>
      %29 = arith.addi %28, %27 : vector<8x1xi32>
      %c8_i32_15 = arith.constant 8 : i32
      %30 = vector.broadcast %c8_i32_15 : i32 to vector<8x1xi32>
      %31 = arith.cmpi slt, %29, %30 : vector<8x1xi32>
      %c0_16 = arith.constant 0 : index
      %c0_17 = arith.constant 0 : index
      %32 = vector.load %arg6[%c0_16, %c0_17] : memref<8x1xf32, #tpu.memory_space<vmem>>, vector<8x1xf32>
      %cst_18 = arith.constant 0.000000e+00 : f32
      %33 = vector.broadcast %cst_18 : f32 to vector<8x1xf32>
      %34 = arith.select %31, %13, %33 : vector<8x1xi1>, vector<8x1xf32>
      %35 = arith.addf %32, %34 : vector<8x1xf32>
      %c0_19 = arith.constant 0 : index
      %c0_20 = arith.constant 0 : index
      %36 = vector.load %arg6[%c0_19, %c0_20] : memref<8x1xf32, #tpu.memory_space<vmem>>, vector<8x1xf32>
      tpu.vector_store %arg6[%c0_19, %c0_20], %35 {strides = array<i32>} : memref<8x1xf32, #tpu.memory_space<vmem>>, vector<8x1xf32>,
    } else {
    }
    %c0_i32_13 = arith.constant 0 : i32
    %24 = arith.cmpi eq, %arg1, %c0_i32_13 : i32
    %25 = arith.extui %24 : i1 to i32
    %c0_i32_14 = arith.constant 0 : i32
    %26 = arith.cmpi ne, %25, %c0_i32_14 : i32
    scf.if %26 {
      %c0_15 = arith.constant 0 : index
      %c0_16 = arith.constant 0 : index
      %27 = vector.load %arg6[%c0_15, %c0_16] : memref<8x1xf32, #tpu.memory_space<vmem>>, vector<8x1xf32>
      %28 = vector.shape_cast %27 : vector<8x1xf32> to vector<1x8x1xf32>
      %cst_17 = arith.constant dense<0.000000e+00> : vector<1xf32>
      %29 = vector.multi_reduction <add>, %28, %cst_17 [1, 2] : vector<1x8x1xf32> to vector<1xf32>
      %30 = vector.shape_cast %29 : vector<1xf32> to vector<1x1x1xf32>
      %31 = vector.extract %30[0, 0, 0] : f32 from vector<1x1x1xf32>
      %32 = vector.broadcast %31 : f32 to vector<1x1x128xf32>
      %c0_18 = arith.constant 0 : index
      %c0_19 = arith.constant 0 : index
      %c0_20 = arith.constant 0 : index
      %33 = vector.load %arg5[%c0_18, %c0_19, %c0_20] : memref<1x1x128xf32, #tpu.memory_space<vmem>>, vector<1x1x128xf32>
      tpu.vector_store %arg5[%c0_18, %c0_19, %c0_20], %32 {strides = array<i32>} : memref<1x1x128xf32, #tpu.memory_space<vmem>>, vector<1x1x128xf32>,
    } else {
    }
    return
  }
  func.func @transform_0(%arg0: i32, %arg1: i32) -> (i32, i32) {
    %c1_i32 = arith.constant 1 : i32
    %0 = arith.muli %arg0, %c1_i32 : i32
    %1 = arith.addi %0, %arg1 : i32
    %c0_i32 = arith.constant 0 : i32
    %c0_i32_0 = arith.constant 0 : i32
    return %1, %c0_i32 : i32, i32
  }
  func.func @transform_1(%arg0: i32, %arg1: i32) -> (i32, i32) {
    %c1_i32 = arith.constant 1 : i32
    %0 = arith.muli %arg0, %c1_i32 : i32
    %1 = arith.addi %0, %arg1 : i32
    %c0_i32 = arith.constant 0 : i32
    %c0_i32_0 = arith.constant 0 : i32
    return %1, %c0_i32 : i32, i32
  }
  func.func @transform_2(%arg0: i32, %arg1: i32) -> (i32, i32) {
    %c1_i32 = arith.constant 1 : i32
    %0 = arith.muli %arg0, %c1_i32 : i32
    %1 = arith.addi %0, %arg1 : i32
    %c0_i32 = arith.constant 0 : i32
    %c0_i32_0 = arith.constant 0 : i32
    return %1, %c0_i32 : i32, i32
  }
  func.func @transform_3(%arg0: i32, %arg1: i32) -> (i32, i32, i32) {
    %c0_i32 = arith.constant 0 : i32
    %c0_i32_0 = arith.constant 0 : i32
    %c0_i32_1 = arith.constant 0 : i32
    return %arg0, %c0_i32, %c0_i32_0 : i32, i32, i32
  }
}

</mosaic_0001>

<llo_original>
// kernel: tpu_custom_call.1
$region0: #{tpu_custom_call.1}
  #allocation0 [shape = 'u32[]', space=smem, size = 0x4, offset = 0x4, fixed_abs, tag = 'smem constant byte address 0x4 - core index']
  #allocation1 [shape = 'u32[144,128]{1,0:T(1,128)}', space=vmem, size = 0x12000, scoped, tag = 'internal scratch']
  #allocation2 [shape = 'f32[8,1]{1,0:T(8,128)}', space=vmem, size = 0x1000, scoped, tag = 'scratch operand']
  %s0 = inlined_call_operand.hbm [shape: f32[8,128], index: 0, kind: input, shape index: {}]
  %s1 = inlined_call_operand.hbm [shape: f32[8,128], index: 1, kind: input, shape index: {}]
  %s2 = inlined_call_operand.hbm [shape: f32[8,128], index: 2, kind: input, shape index: {}]
  %s3 = inlined_call_operand.hbm [shape: f32[1,1,128], index: 3, kind: output, shape index: {}]
  %s4 = sld [smem:[#allocation0]]
  $region50: #{tpu_custom_call.1} parent=0
    _
  %s6 = ssub.s32 1, %s4
  %s7 = scalar_select 0, %s6, %s4
  $region1: #{tpu_custom_call.1} parent=0
    #allocation3 [shape = 'u8[4096]{0}', space=vmem, size = 0x1000, scoped, tag = 'input window, operand 0, single buffered']
    #allocation4 [shape = 's32[1]{0}', space=sflag, size = 0x4, scoped, tag = 'scoped memory for tpu_custom_call.1']
    #allocation5 [shape = 's32[1]{0}', space=sflag, size = 0x4, scoped, tag = 'scoped memory for tpu_custom_call.1']
    #allocation6 [shape = 'u8[4096]{0}', space=vmem, size = 0x1000, scoped, tag = 'input window, operand 1, single buffered']
    #allocation7 [shape = 's32[1]{0}', space=sflag, size = 0x4, scoped, tag = 'scoped memory for tpu_custom_call.1']
    #allocation8 [shape = 'u8[4096]{0}', space=vmem, size = 0x1000, scoped, tag = 'input window, operand 2, single buffered']
    #allocation9 [shape = 'u8[512]{0}', space=vmem, size = 0x400, scoped, tag = 'output window, operand 0, single buffered']
    %8 = vsyncpa [#allocation4], 0
    %9 = vsyncpa [#allocation7], 0
    %10 = vsyncpa [#allocation5], 0
    // Predicated region
    $region2: #{tpu_custom_call.1} parent=1 // pred_check
      _
    $region3: #{tpu_custom_call.1} parent=1 // pred_check_branch
      %12 = sbr.rel (0) target = $region5
    $region4: #{tpu_custom_call.1} parent=1 // pred_region
      %s13 = sadd.s32 0, 0
      %s15 = ssub.s32 128, 128
      %16 = vsyncadd [#allocation4], %s15
      %s17 = smul.addr %s13, 128
      %s18 = scalar_lea.hbm %s0, %s17
      %s20 = sshll.u32 [#allocation3], 4
      %s21 = int_to_ptr.vmem [resolvable:$true] %s20
      %23 = dma.hbm_to_vmem [thread:$0]  %s18, 128, %s21, [#allocation4]
    $region5: #{tpu_custom_call.1} parent=1 // pred_fallthru
      _
    // Predicated region
    $region6: #{tpu_custom_call.1} parent=1 // pred_check
      _
    $region7: #{tpu_custom_call.1} parent=1 // pred_check_branch
      %25 = sbr.rel (0) target = $region9
    $region8: #{tpu_custom_call.1} parent=1 // pred_region
      %s26 = sadd.s32 0, 0
      %s28 = ssub.s32 128, 128
      %29 = vsyncadd [#allocation7], %s28
      %s30 = smul.addr %s26, 128
      %s31 = scalar_lea.hbm %s1, %s30
      %s33 = sshll.u32 [#allocation6], 4
      %s34 = int_to_ptr.vmem [resolvable:$true] %s33
      %36 = dma.hbm_to_vmem [thread:$0]  %s31, 128, %s34, [#allocation7]
    $region9: #{tpu_custom_call.1} parent=1 // pred_fallthru
      _
    // Predicated region
    $region10: #{tpu_custom_call.1} parent=1 // pred_check
      _
    $region11: #{tpu_custom_call.1} parent=1 // pred_check_branch
      %38 = sbr.rel (0) target = $region13
    $region12: #{tpu_custom_call.1} parent=1 // pred_region
      %s39 = sadd.s32 0, 0
      %s41 = ssub.s32 128, 128
      %42 = vsyncadd [#allocation7], %s41
      %s43 = smul.addr %s39, 128
      %s44 = scalar_lea.hbm %s2, %s43
      %s46 = sshll.u32 [#allocation8], 4
      %s47 = int_to_ptr.vmem [resolvable:$true] %s46
      %49 = dma.hbm_to_vmem [thread:$0]  %s44, 128, %s47, [#allocation7]
    $region13: #{tpu_custom_call.1} parent=1 // pred_fallthru
      _
    // Predicated region
    $region14: #{tpu_custom_call.1} parent=1 // pred_check
      _
    $region15: #{tpu_custom_call.1} parent=1 // pred_check_branch
      %51 = sbr.rel (0) target = $region17
    $region16: #{tpu_custom_call.1} parent=1 // pred_region
      %52 = dma.done [#allocation4], 128
    $region17: #{tpu_custom_call.1} parent=1 // pred_fallthru
      _
    // Predicated region
    $region18: #{tpu_custom_call.1} parent=1 // pred_check
      _
    $region19: #{tpu_custom_call.1} parent=1 // pred_check_branch
      %54 = sbr.rel (0) target = $region21
    $region20: #{tpu_custom_call.1} parent=1 // pred_region
      %55 = dma.done [#allocation7], 128
    $region21: #{tpu_custom_call.1} parent=1 // pred_fallthru
      _
    // Predicated region
    $region22: #{tpu_custom_call.1} parent=1 // pred_check
      _
    $region23: #{tpu_custom_call.1} parent=1 // pred_check_branch
      %57 = sbr.rel (0) target = $region25
    $region24: #{tpu_custom_call.1} parent=1 // pred_region
      %58 = dma.done [#allocation7], 128
    $region25: #{tpu_custom_call.1} parent=1 // pred_fallthru
      _
    %s59 = sadd.s32 0, 0
    %s60 = sadd.s32 0, 0
    %s61 = sadd.s32 0, 0
    %p62 = scmp.eq.s32.totalorder 0, 0
    // Predicated region
    $region26: #{tpu_custom_call.1} parent=1 // pred_check
      %p63 = pneg %p62
    $region27: #{tpu_custom_call.1} parent=1 // pred_check_branch
      %65 = sbr.rel (%p63) target = $region29
    $region28: #{tpu_custom_call.1} parent=1 // pred_region
      %vm66 = vcmask 7168
      %67 = vst.msk [vmem:[#allocation2] sm:$0xff] %vm66, 0.0
    $region29: #{tpu_custom_call.1} parent=1 // pred_fallthru
      _
    %v68 = vld [vmem:[#allocation3] sm:$0xff]
    %v69 = vld [vmem:[#allocation6] sm:$0xff]
    %v70 = vld [vmem:[#allocation8] sm:$0xff]
    %v71 = vsub.f32 %v70, %v69
    %v72 = vmul.f32 %v68, %v71
    %73 = vadd.xlane.f32.xlu0 %v72
    %v74 = vpop.xlane.xlu0 %73
    %v75 = vadd.f32 %v74, 0.5
    %v76 = vmax.f32 %v75, 0.0
    %s77 = smul.u32 0, 8
    %s78 = smul.u32 0, 8
    %s79 = sadd.s32 %s77, %s78
    %s80 = sadd.s32 %s79, 8
    %p81 = scmp.le.s32.totalorder %s80, 8
    // Predicated region
    $region30: #{tpu_custom_call.1} parent=1 // pred_check
      %p82 = pneg %p81
    $region31: #{tpu_custom_call.1} parent=1 // pred_check_branch
      %84 = sbr.rel (%p82) target = $region33
    $region32: #{tpu_custom_call.1} parent=1 // pred_region
      %v85 = vld [vmem:[#allocation2] sm:$0xff]
      %v86 = vadd.f32 %v85, %v76
      %vm87 = vcmask 7168
      %88 = vst.msk [vmem:[#allocation2] sm:$0xff] %vm87, %v86
    $region33: #{tpu_custom_call.1} parent=1 // pred_fallthru
      _
    %p89 = scmp.gt.s32.totalorder %s80, 8
    // Predicated region
    $region34: #{tpu_custom_call.1} parent=1 // pred_check
      %p90 = pneg %p89
    $region35: #{tpu_custom_call.1} parent=1 // pred_check_branch
      %92 = sbr.rel (%p90) target = $region37
    $region36: #{tpu_custom_call.1} parent=1 // pred_region
      %v93 = vlaneseq
      %v94 = vshrl.u32 %v93, 7
      %v95 = vstv %s79
      %v96 = vadd.s32 %v95, %v94
      %vm97 = vcmp.lt.s32.totalorder %v96, 8
      %v98 = vld [vmem:[#allocation2] sm:$0xff]
      %v99 = vsel %vm97, %v76, 0.0
      %v100 = vadd.f32 %v98, %v99
      %vm101 = vcmask 7168
      %102 = vst.msk [vmem:[#allocation2] sm:$0xff] %vm101, %v100
    $region37: #{tpu_custom_call.1} parent=1 // pred_fallthru
      _
    // Predicated region
    $region38: #{tpu_custom_call.1} parent=1 // pred_check
      %p103 = pneg %p62
    $region39: #{tpu_custom_call.1} parent=1 // pred_check_branch
      %105 = sbr.rel (%p103) target = $region41
    $region40: #{tpu_custom_call.1} parent=1 // pred_region
      %v106 = vld [vmem:[#allocation2] sm:$0xff]
      %vm107 = vcmask 7168
      %v108 = vsel %vm107, %v106, 0.0
      %109 = vadd.xlane.f32.xlu0 %v108
      %v110 = vpop.xlane.xlu0 %109
      %v111 = vrot.slane %v110, 4
      %v112 = vadd.f32 %v110, %v111
      %v113 = vrot.slane %v112, 2
      %v114 = vadd.f32 %v112, %v113
      %v115 = vrot.slane %v114, 1
      %v116 = vadd.f32 %v114, %v115
      %s117 = vtos %v116
      %v118 = vstv %s117
      %119 = vst [vmem:[#allocation9] sm:$0x1] %v118
    $region41: #{tpu_custom_call.1} parent=1 // pred_fallthru
      _
    // Predicated region
    $region42: #{tpu_custom_call.1} parent=1 // pred_check
      _
    $region43: #{tpu_custom_call.1} parent=1 // pred_check_branch
      %121 = sbr.rel (0) target = $region45
    $region44: #{tpu_custom_call.1} parent=1 // pred_region
      %s123 = ssub.s32 16, 16
      %124 = vsyncadd [#allocation5], %s123
      %s126 = sshll.u32 [#allocation9], 4
      %s127 = int_to_ptr.vmem [resolvable:$true] %s126
      %129 = dma.vmem_to_hbm [thread:$0]  %s127, 16, %s3, [#allocation5]
    $region45: #{tpu_custom_call.1} parent=1 // pred_fallthru
      _
    // Predicated region
    $region46: #{tpu_custom_call.1} parent=1 // pred_check
      _
    $region47: #{tpu_custom_call.1} parent=1 // pred_check_branch
      %131 = sbr.rel (0) target = $region49
    $region48: #{tpu_custom_call.1} parent=1 // pred_region
      %132 = dma.done [#allocation5], 16
    $region49: #{tpu_custom_call.1} parent=1 // pred_fallthru
      _
    %133 = vsyncpa [#allocation4], 1
    %134 = vsyncpa [#allocation7], 1
    %135 = vsyncpa [#allocation5], 1

</llo_original>
